<compile_context>
chip_gen: v7x
topology: tpu7x:2x2x1
jax: 0.10.0
libtpu: 0.0.40
codegen_flags: <defaults>
</compile_context>

<pallas_src>
import jax
import jax.numpy as jnp
from jax import lax
from jax.experimental import pallas as pl
from jax.experimental.pallas import tpu as pltpu

# Any value >= 0.01 works: its seg_inp is 0, i.e. exactly conv2d's zero pad.
_PAD_VALUE = 1.0
_TINY_BYTES = 1 << 20


def conv2clothes_kernel(seg_ref, out_ref):
    seg = seg_ref[...]                           # (B, H, W) float32 slab
    B, H, W = seg.shape

    # seg_inp = (original_seg < 0.01) * 1.0  -> accumulate 0/1 directly.
    x = (seg < 0.01).astype(jnp.float32)

    # Tiny hoisted edge masks (broadcast along lanes/sublanes).  These replace
    # full-size (B,H,W) iotas + compare + select with one multiply per shift.
    h_iota = lax.broadcasted_iota(jnp.int32, (1, H, 1), 1)
    w_iota = lax.broadcasted_iota(jnp.int32, (1, 1, W), 2)
    m_up = (h_iota < H - 1).astype(jnp.float32)   # zero the row that wrapped from the top
    m_dn = (h_iota > 0).astype(jnp.float32)       # zero the row that wrapped from the bottom
    m_lf = (w_iota < W - 1).astype(jnp.float32)
    m_rt = (w_iota > 0).astype(jnp.float32)

    # Separable 3x3 all-ones conv with zero padding == 4 XLU rolls + edge masks.
    up = pltpu.roll(x, H - 1, axis=1)             # up[:, i, :] = x[:, i+1, :]
    dn = pltpu.roll(x, 1, axis=1)                 # dn[:, i, :] = x[:, i-1, :]
    rowsum = x + up * m_up + dn * m_dn

    lf = pltpu.roll(rowsum, W - 1, axis=2)        # lf[..., j] = rowsum[..., j+1]
    rt = pltpu.roll(rowsum, 1, axis=2)            # rt[..., j] = rowsum[..., j-1]
    conv = rowsum + lf * m_lf + rt * m_rt

    # clothes = ((seg_out > 0.01) & (original_seg > 0.01)) * 1.0
    out_ref[...] = jnp.where((conv > 0.01) & (seg > 0.01), 1.0, 0.0).astype(out_ref.dtype)


def _round_up(x, m):
    return ((x + m - 1) // m) * m


def _vmem_capacity_bytes():
    try:
        info = pltpu.get_tpu_info()
        cap = getattr(info, "vmem_capacity_bytes", None)
        if cap:
            return int(cap)
    except Exception:
        pass
    return 64 * 1024 * 1024     # conservative: v7x per-TensorCore VMEM


def _vmem_limit_bytes(block_bytes, vmem_cap):
    needed = 4 * block_bytes + (4 << 20)          # in + out, double buffered, + slack
    return int(min(max(needed, 32 << 20), (vmem_cap * 3) // 4))


def _pick_images_per_block(n_img, per_image_bytes, block_budget_bytes):
    cap = max(1, block_budget_bytes // per_image_bytes)
    b = min(n_img, cap)
    total = n_img * per_image_bytes
    if total <= _TINY_BYTES:
        # Tiny input: one block, skip per-step overhead entirely.
        return b
    # Large input: keep >= 8 grid steps so each v7x TensorCore gets >= 4
    # pipelined iterations (prefetch i+1 / writeback i-1 hide under compute).
    while b > 1 and (n_img + b - 1) // b < 8:
        b -= 1
    return b


def conv2clothes(original_seg, *, block_budget_bytes=None):
    """original_seg: (N, 1, H, W) -> (N, 1, H, W) float32."""
    N, C, H, W = original_seg.shape
    assert C == 1, "Conv2clothes filter is (1,1,3,3); single channel expected"
    n_img = N * C
    x = original_seg.reshape(n_img, H, W).astype(jnp.float32)

    # Lane/sublane-dense padding (padded values behave like conv zero padding).
    h_pad = _round_up(H, 8)
    w_pad = _round_up(W, 128)
    x = jnp.pad(x, ((0, 0), (0, h_pad - H), (0, w_pad - W)),
                constant_values=_PAD_VALUE)

    vmem_cap = _vmem_capacity_bytes()
    if block_budget_bytes is None:
        # ~4 MiB blocks on v7x (64 MiB VMEM), ~8 MiB on v5e/v6e (128 MiB).
        block_budget_bytes = max(1 << 20, min(8 << 20, vmem_cap // 16))
    itemsize = 4
    per_image = h_pad * w_pad * itemsize

    if per_image <= block_budget_bytes:
        # ---------- whole-image blocks, batch-tiled grid ----------
        b = _pick_images_per_block(n_img, per_image, block_budget_bytes)
        n_pad = _round_up(n_img, b)
        if n_pad > n_img:
            x = jnp.pad(x, ((0, n_pad - n_img), (0, 0), (0, 0)),
                        constant_values=_PAD_VALUE)
        block_bytes = b * per_image
        out = pl.pallas_call(
            conv2clothes_kernel,
            out_shape=jax.ShapeDtypeStruct((n_pad, h_pad, w_pad), jnp.float32),
            grid=(n_pad // b,),
            in_specs=[pl.BlockSpec((b, h_pad, w_pad), lambda i: (i, 0, 0))],
            out_specs=pl.BlockSpec((b, h_pad, w_pad), lambda i: (i, 0, 0)),
            compiler_params=pltpu.CompilerParams(
                dimension_semantics=("parallel",),
                vmem_limit_bytes=_vmem_limit_bytes(block_bytes, vmem_cap)),
        )(x)
        out = out[:n_img, :H, :W]
        return out.reshape(N, C, H, W)

    # ---------- H-strip fallback with a 1-row halo (image block too big) ----------
    # TODO(synk): this duplicates 2 halo rows per strip in HBM via an XLA
    # gather; an in-kernel halo DMA (manual double-buffer) would avoid it.
    rows = max(8, ((block_budget_bytes // (w_pad * itemsize)) // 8) * 8)
    rows = min(rows, h_pad)
    n_strips = (h_pad + rows - 1) // rows
    strip_h = _round_up(rows + 2, 8)              # keep rolls sublane-aligned
    h_total = (n_strips - 1) * rows + strip_h
    top, bottom = 1, h_total - h_pad - 1
    xp = jnp.pad(x, ((0, 0), (top, bottom), (0, 0)), constant_values=_PAD_VALUE)

    strips = jnp.stack(
        [xp[:, s * rows: s * rows + strip_h, :] for s in range(n_strips)], axis=1)
    strips = strips.reshape(n_img * n_strips, strip_h, w_pad)
    n_blocks = n_img * n_strips
    strip_bytes = strip_h * w_pad * itemsize

    out = pl.pallas_call(
        conv2clothes_kernel,
        out_shape=jax.ShapeDtypeStruct((n_blocks, strip_h, w_pad), jnp.float32),
        grid=(n_blocks,),
        in_specs=[pl.BlockSpec((1, strip_h, w_pad), lambda i: (i, 0, 0))],
        out_specs=pl.BlockSpec((1, strip_h, w_pad), lambda i: (i, 0, 0)),
        compiler_params=pltpu.CompilerParams(
            dimension_semantics=("parallel",),
            vmem_limit_bytes=_vmem_limit_bytes(strip_bytes, vmem_cap)),
    )(strips)

    out = out.reshape(n_img, n_strips, strip_h, w_pad)[:, :, 1:rows + 1, :]
    out = out.reshape(n_img, n_strips * rows, w_pad)[:, :H, :W]
    return out.reshape(N, C, H, W)


def conv2clothes_ref(original_seg):
    """Plain-JAX reference (mirrors the PyTorch module)."""
    seg = original_seg.astype(jnp.float32)
    seg_inp = (seg < 0.01).astype(jnp.float32)
    filt = jnp.ones((1, 1, 3, 3), jnp.float32)    # the module's ones(1,1,3,3) buffer
    seg_out = lax.conv_general_dilated(
        seg_inp, filt, window_strides=(1, 1), padding=((1, 1), (1, 1)),
        dimension_numbers=("NCHW", "OIHW", "NCHW"))
    return ((seg_out > 0.01) & (seg > 0.01)).astype(jnp.float32)


if __name__ == "__main__":
    key = jax.random.PRNGKey(0)

    # Aligned case (H mult of 8, W mult of 128).
    N, C, H, W = 2, 1, 16, 128
    seg = jax.random.uniform(key, (N, C, H, W), dtype=jnp.float32)
    zmask = jax.random.bernoulli(jax.random.PRNGKey(1), 0.3, (N, C, H, W))
    seg = jnp.where(zmask, 0.0, seg)

    out = jax.block_until_ready(conv2clothes(seg))
    ref = jax.block_until_ready(conv2clothes_ref(seg))
    assert out.shape == ref.shape and out.dtype == ref.dtype
    assert bool(jnp.array_equal(out, ref)), "Pallas kernel mismatch (aligned case)"

    # Non-aligned H/W exercise the lane/sublane padding path.
    seg2 = jax.random.uniform(jax.random.PRNGKey(2), (3, 1, 13, 200), dtype=jnp.float32)
    seg2 = jnp.where(jax.random.bernoulli(jax.random.PRNGKey(3), 0.4, seg2.shape),
                     0.0, seg2)
    out2 = jax.block_until_ready(conv2clothes(seg2))
    ref2 = jax.block_until_ready(conv2clothes_ref(seg2))
    assert bool(jnp.array_equal(out2, ref2)), "Pallas kernel mismatch (unaligned case)"

    # Force the H-strip halo fallback (path used for images too large for VMEM).
    out3 = jax.block_until_ready(conv2clothes(seg2, block_budget_bytes=4096))
    assert bool(jnp.array_equal(out3, ref2)), "Pallas kernel mismatch (strip fallback)"

    print("KERNEL_OK")
</pallas_src>

<mosaic_0001>
module attributes {stable_mosaic.version = 11 : i64} {
  func.func @conv2clothes_kernel(%arg0: i32, %arg1: memref<2x16x128xf32, #tpu.memory_space<vmem>>, %arg2: memref<2x16x128xf32, #tpu.memory_space<vmem>>) attributes {dimension_semantics = [#tpu.dimension_semantics<parallel>], iteration_bounds = array<i64: 1>, scalar_prefetch = 0 : i64, scratch_operands = 0 : i64, tpu.core_type = #tpu.core_type<tc>, window_params = [{transform_indices = @transform_0, window_bounds = array<i64: 2, 16, 128>}, {transform_indices = @transform_1, window_bounds = array<i64: 2, 16, 128>}]} {
    %c0 = arith.constant 0 : index
    %c0_0 = arith.constant 0 : index
    %c0_1 = arith.constant 0 : index
    %0 = vector.load %arg1[%c0, %c0_0, %c0_1] : memref<2x16x128xf32, #tpu.memory_space<vmem>>, vector<2x16x128xf32>
    %cst = arith.constant 0.00999999977 : f32
    %1 = vector.broadcast %cst : f32 to vector<2x16x128xf32>
    %2 = arith.cmpf olt, %0, %1 : vector<2x16x128xf32>
    %3 = arith.extui %2 : vector<2x16x128xi1> to vector<2x16x128xi32>
    %4 = arith.sitofp %3 : vector<2x16x128xi32> to vector<2x16x128xf32>
    %5 = tpu.iota {dimensions = array<i32: 1>} : vector<1x16x1xi32>
    %6 = tpu.iota {dimensions = array<i32: 2>} : vector<1x1x128xi32>
    %c15_i32 = arith.constant 15 : i32
    %7 = vector.broadcast %c15_i32 : i32 to vector<1x16x1xi32>
    %8 = arith.cmpi slt, %5, %7 : vector<1x16x1xi32>
    %9 = arith.extui %8 : vector<1x16x1xi1> to vector<1x16x1xi32>
    %10 = arith.sitofp %9 : vector<1x16x1xi32> to vector<1x16x1xf32>
    %c0_i32 = arith.constant 0 : i32
    %11 = vector.broadcast %c0_i32 : i32 to vector<1x16x1xi32>
    %12 = arith.cmpi sgt, %5, %11 : vector<1x16x1xi32>
    %13 = arith.extui %12 : vector<1x16x1xi1> to vector<1x16x1xi32>
    %14 = arith.sitofp %13 : vector<1x16x1xi32> to vector<1x16x1xf32>
    %c127_i32 = arith.constant 127 : i32
    %15 = vector.broadcast %c127_i32 : i32 to vector<1x1x128xi32>
    %16 = arith.cmpi slt, %6, %15 : vector<1x1x128xi32>
    %17 = arith.extui %16 : vector<1x1x128xi1> to vector<1x1x128xi32>
    %18 = arith.sitofp %17 : vector<1x1x128xi32> to vector<1x1x128xf32>
    %c0_i32_2 = arith.constant 0 : i32
    %19 = vector.broadcast %c0_i32_2 : i32 to vector<1x1x128xi32>
    %20 = arith.cmpi sgt, %6, %19 : vector<1x1x128xi32>
    %21 = arith.extui %20 : vector<1x1x128xi1> to vector<1x1x128xi32>
    %22 = arith.sitofp %21 : vector<1x1x128xi32> to vector<1x1x128xf32>
    %c15_i32_3 = arith.constant 15 : i32
    %23 = tpu.dynamic_rotate %4 by %c15_i32_3 dim 1 : vector<2x16x128xf32>, i32 -> vector<2x16x128xf32>
    %c1_i32 = arith.constant 1 : i32
    %24 = tpu.dynamic_rotate %4 by %c1_i32 dim 1 : vector<2x16x128xf32>, i32 -> vector<2x16x128xf32>
    %25 = vector.broadcast %10 : vector<1x16x1xf32> to vector<2x16x128xf32>
    %26 = arith.mulf %23, %25 : vector<2x16x128xf32>
    %27 = arith.addf %4, %26 : vector<2x16x128xf32>
    %28 = vector.broadcast %14 : vector<1x16x1xf32> to vector<2x16x128xf32>
    %29 = arith.mulf %24, %28 : vector<2x16x128xf32>
    %30 = arith.addf %27, %29 : vector<2x16x128xf32>
    %c127_i32_4 = arith.constant 127 : i32
    %31 = tpu.dynamic_rotate %30 by %c127_i32_4 dim 2 : vector<2x16x128xf32>, i32 -> vector<2x16x128xf32>
    %c1_i32_5 = arith.constant 1 : i32
    %32 = tpu.dynamic_rotate %30 by %c1_i32_5 dim 2 : vector<2x16x128xf32>, i32 -> vector<2x16x128xf32>
    %33 = vector.broadcast %18 : vector<1x1x128xf32> to vector<2x16x128xf32>
    %34 = arith.mulf %31, %33 : vector<2x16x128xf32>
    %35 = arith.addf %30, %34 : vector<2x16x128xf32>
    %36 = vector.broadcast %22 : vector<1x1x128xf32> to vector<2x16x128xf32>
    %37 = arith.mulf %32, %36 : vector<2x16x128xf32>
    %38 = arith.addf %35, %37 : vector<2x16x128xf32>
    %cst_6 = arith.constant 0.00999999977 : f32
    %39 = vector.broadcast %cst_6 : f32 to vector<2x16x128xf32>
    %40 = arith.cmpf ogt, %38, %39 : vector<2x16x128xf32>
    %cst_7 = arith.constant 0.00999999977 : f32
    %41 = vector.broadcast %cst_7 : f32 to vector<2x16x128xf32>
    %42 = arith.cmpf ogt, %0, %41 : vector<2x16x128xf32>
    %43 = arith.andi %40, %42 : vector<2x16x128xi1>
    %cst_8 = arith.constant 1.000000e+00 : f32
    %cst_9 = arith.constant 0.000000e+00 : f32
    %44 = vector.broadcast %cst_8 : f32 to vector<2x16x128xf32>
    %45 = vector.broadcast %cst_9 : f32 to vector<2x16x128xf32>
    %46 = arith.select %43, %44, %45 : vector<2x16x128xi1>, vector<2x16x128xf32>
    %c0_10 = arith.constant 0 : index
    %c0_11 = arith.constant 0 : index
    %c0_12 = arith.constant 0 : index
    %47 = vector.load %arg2[%c0_10, %c0_11, %c0_12] : memref<2x16x128xf32, #tpu.memory_space<vmem>>, vector<2x16x128xf32>
    tpu.vector_store %arg2[%c0_10, %c0_11, %c0_12], %46 {strides = array<i32>} : memref<2x16x128xf32, #tpu.memory_space<vmem>>, vector<2x16x128xf32>,
    return
  }
  func.func @transform_0(%arg0: i32) -> (i32, i32, i32) {
    %c0_i32 = arith.constant 0 : i32
    %c0_i32_0 = arith.constant 0 : i32
    %c0_i32_1 = arith.constant 0 : i32
    return %arg0, %c0_i32, %c0_i32_0 : i32, i32, i32
  }
  func.func @transform_1(%arg0: i32) -> (i32, i32, i32) {
    %c0_i32 = arith.constant 0 : i32
    %c0_i32_0 = arith.constant 0 : i32
    %c0_i32_1 = arith.constant 0 : i32
    return %arg0, %c0_i32, %c0_i32_0 : i32, i32, i32
  }
}

</mosaic_0001>

<llo_original>
// kernel: tpu_custom_call.1
$region0: #{tpu_custom_call.1}
  #allocation0 [shape = 'u32[]', space=smem, size = 0x4, offset = 0x4, fixed_abs, tag = 'smem constant byte address 0x4 - core index']
  #allocation1 [shape = 'u32[144,128]{1,0:T(1,128)}', space=vmem, size = 0x12000, scoped, tag = 'internal scratch']
  %s0 = inlined_call_operand.hbm [shape: f32[2,16,128], index: 0, kind: input, shape index: {}]
  %s1 = inlined_call_operand.hbm [shape: f32[2,16,128], index: 1, kind: output, shape index: {}]
  %s2 = sld [smem:[#allocation0]]
  $region18: #{tpu_custom_call.1} parent=0
    _
  %s4 = ssub.s32 1, %s2
  %s5 = scalar_select 0, %s4, %s2
  $region1: #{tpu_custom_call.1} parent=0
    #allocation2 [shape = 'u8[16384]{0}', space=vmem, size = 0x4000, scoped, tag = 'input window, operand 0, single buffered']
    #allocation3 [shape = 's32[1]{0}', space=sflag, size = 0x4, scoped, tag = 'scoped memory for tpu_custom_call.1']
    #allocation4 [shape = 's32[1]{0}', space=sflag, size = 0x4, scoped, tag = 'scoped memory for tpu_custom_call.1']
    #allocation5 [shape = 'u8[16384]{0}', space=vmem, size = 0x4000, scoped, tag = 'output window, operand 0, single buffered']
    %6 = vsyncpa [#allocation3], 0
    %7 = vsyncpa [#allocation4], 0
    // Predicated region
    $region2: #{tpu_custom_call.1} parent=1 // pred_check
      _
    $region3: #{tpu_custom_call.1} parent=1 // pred_check_branch
      %9 = sbr.rel (0) target = $region5
    $region4: #{tpu_custom_call.1} parent=1 // pred_region
      %s11 = ssub.s32 512, 512
      %12 = vsyncadd [#allocation3], %s11
      %s13 = sshll.u32 [#allocation2], 4
      %s14 = int_to_ptr.vmem [resolvable:$true] %s13
      %19 = dma.hbm_to_vmem [thread:$0]  %s0, 512, %s14, [#allocation3], 128, 128, 8
    $region5: #{tpu_custom_call.1} parent=1 // pred_fallthru
      _
    // Predicated region
    $region6: #{tpu_custom_call.1} parent=1 // pred_check
      _
    $region7: #{tpu_custom_call.1} parent=1 // pred_check_branch
      %21 = sbr.rel (0) target = $region9
    $region8: #{tpu_custom_call.1} parent=1 // pred_region
      %22 = dma.done [#allocation3], 512
    $region9: #{tpu_custom_call.1} parent=1 // pred_fallthru
      _
    %v23 = vld [vmem:[#allocation2] sm:$0xff]
    %v24 = vld [vmem:[#allocation2 + $0x8] sm:$0xff]
    %v25 = vld [vmem:[#allocation2 + $0x10] sm:$0xff]
    %v26 = vld [vmem:[#allocation2 + $0x18] sm:$0xff]
    %vm27 = vcmp.lt.f32.partialorder %v23, 0.01
    %vm28 = vcmp.lt.f32.partialorder %v24, 0.01
    %vm29 = vcmp.lt.f32.partialorder %v25, 0.01
    %vm30 = vcmp.lt.f32.partialorder %v26, 0.01
    %v31 = vsel %vm27, 1, 0
    %v32 = vsel %vm28, 1, 0
    %v33 = vsel %vm29, 1, 0
    %v34 = vsel %vm30, 1, 0
    %v35 = vcvt.s32.f32 %v31
    %v36 = vcvt.s32.f32 %v32
    %v37 = vcvt.s32.f32 %v33
    %v38 = vcvt.s32.f32 %v34
    %v39 = vlaneseq
    %v40 = vshrl.u32 %v39, 7
    %v41 = vadd.s32 %v40, 8
    %v42 = vlaneseq
    %v43 = vand.u32 %v42, 127
    %vm44 = vcmp.lt.s32.totalorder %v40, 15
    %vm45 = vcmp.lt.s32.totalorder %v41, 15
    %v46 = vsel %vm44, 1, 0
    %v47 = vsel %vm45, 1, 0
    %v48 = vcvt.s32.f32 %v46
    %v49 = vcvt.s32.f32 %v47
    %vm50 = vcmp.gt.s32.totalorder %v40, 0
    %vm51 = vcmp.gt.s32.totalorder %v41, 0
    %v52 = vsel %vm50, 1, 0
    %v53 = vsel %vm51, 1, 0
    %v54 = vcvt.s32.f32 %v52
    %v55 = vcvt.s32.f32 %v53
    %vm56 = vcmp.lt.s32.totalorder %v43, 127
    %v57 = vsel %vm56, 1, 0
    %v58 = vcvt.s32.f32 %v57
    %vm59 = vcmp.gt.s32.totalorder %v43, 0
    %v60 = vsel %vm59, 1, 0
    %v61 = vcvt.s32.f32 %v60
    %v62 = vrot.slane %v35, 1
    %v63 = vrot.slane %v37, 1
    %v64 = vrot.slane %v36, 1
    %v65 = vrot.slane %v38, 1
    %vm66 = vcmp.lt.s32.totalorder %v40, 7
    %v67 = vsel %vm66, %v62, %v64
    %v68 = vsel %vm66, %v63, %v65
    %v69 = vsel %vm66, %v64, %v62
    %v70 = vsel %vm66, %v65, %v63
    %v71 = vrot.slane %v35, 7
    %v72 = vrot.slane %v37, 7
    %v73 = vrot.slane %v36, 7
    %v74 = vrot.slane %v38, 7
    %vm75 = vcmp.lt.s32.totalorder %v40, 1
    %v76 = vsel %vm75, %v71, %v73
    %v77 = vsel %vm75, %v72, %v74
    %v78 = vsel %vm75, %v73, %v71
    %v79 = vsel %vm75, %v74, %v72
    %v80 = vmul.f32 %v67, %v48
    %v81 = vmul.f32 %v69, %v49
    %v82 = vmul.f32 %v68, %v48
    %v83 = vmul.f32 %v70, %v49
    %v84 = vadd.f32 %v35, %v80
    %v85 = vadd.f32 %v36, %v81
    %v86 = vadd.f32 %v37, %v82
    %v87 = vadd.f32 %v38, %v83
    %v88 = vmul.f32 %v78, %v54
    %v89 = vmul.f32 %v76, %v55
    %v90 = vmul.f32 %v79, %v54
    %v91 = vmul.f32 %v77, %v55
    %v92 = vadd.f32 %v84, %v88
    %v93 = vadd.f32 %v85, %v89
    %v94 = vadd.f32 %v86, %v90
    %v95 = vadd.f32 %v87, %v91
    %96 = vrot.lane.b32.xlu0 %v92, 127
    %v97 = vpop.permute.xlu0 %96
    %98 = vrot.lane.b32.xlu0 %v93, 127
    %v99 = vpop.permute.xlu0 %98
    %100 = vrot.lane.b32.xlu0 %v94, 127
    %v101 = vpop.permute.xlu0 %100
    %102 = vrot.lane.b32.xlu0 %v95, 127
    %v103 = vpop.permute.xlu0 %102
    %104 = vrot.lane.b32.xlu0 %v92, 1
    %v105 = vpop.permute.xlu0 %104
    %106 = vrot.lane.b32.xlu0 %v93, 1
    %v107 = vpop.permute.xlu0 %106
    %108 = vrot.lane.b32.xlu0 %v94, 1
    %v109 = vpop.permute.xlu0 %108
    %110 = vrot.lane.b32.xlu0 %v95, 1
    %v111 = vpop.permute.xlu0 %110
    %v112 = vmul.f32 %v97, %v58
    %v113 = vmul.f32 %v99, %v58
    %v114 = vmul.f32 %v101, %v58
    %v115 = vmul.f32 %v103, %v58
    %v116 = vadd.f32 %v92, %v112
    %v117 = vadd.f32 %v93, %v113
    %v118 = vadd.f32 %v94, %v114
    %v119 = vadd.f32 %v95, %v115
    %v120 = vmul.f32 %v105, %v61
    %v121 = vmul.f32 %v107, %v61
    %v122 = vmul.f32 %v109, %v61
    %v123 = vmul.f32 %v111, %v61
    %v124 = vadd.f32 %v116, %v120
    %v125 = vadd.f32 %v117, %v121
    %v126 = vadd.f32 %v118, %v122
    %v127 = vadd.f32 %v119, %v123
    %vm128 = vcmp.gt.f32.partialorder %v124, 0.01
    %vm129 = vcmp.gt.f32.partialorder %v125, 0.01
    %vm130 = vcmp.gt.f32.partialorder %v126, 0.01
    %vm131 = vcmp.gt.f32.partialorder %v127, 0.01
    %vm132 = vcmp.gt.f32.partialorder %v23, 0.01
    %vm133 = vcmp.gt.f32.partialorder %v24, 0.01
    %vm134 = vcmp.gt.f32.partialorder %v25, 0.01
    %vm135 = vcmp.gt.f32.partialorder %v26, 0.01
    %vm136 = vmand %vm128, %vm132
    %vm137 = vmand %vm129, %vm133
    %vm138 = vmand %vm130, %vm134
    %vm139 = vmand %vm131, %vm135
    %v140 = vsel %vm136, 1.0, 0.0
    %v141 = vsel %vm137, 1.0, 0.0
    %v142 = vsel %vm138, 1.0, 0.0
    %v143 = vsel %vm139, 1.0, 0.0
    %144 = vst [vmem:[#allocation5] sm:$0xff] %v140
    %145 = vst [vmem:[#allocation5 + $0x8] sm:$0xff] %v141
    %146 = vst [vmem:[#allocation5 + $0x10] sm:$0xff] %v142
    %147 = vst [vmem:[#allocation5 + $0x18] sm:$0xff] %v143
    // Predicated region
    $region10: #{tpu_custom_call.1} parent=1 // pred_check
      _
    $region11: #{tpu_custom_call.1} parent=1 // pred_check_branch
      %149 = sbr.rel (0) target = $region13
    $region12: #{tpu_custom_call.1} parent=1 // pred_region
      %s151 = ssub.s32 512, 512
      %152 = vsyncadd [#allocation4], %s151
      %s153 = sshll.u32 [#allocation5], 4
      %s154 = int_to_ptr.vmem [resolvable:$true] %s153
      %159 = dma.vmem_to_hbm [thread:$0]  %s154, 512, %s1, [#allocation4], 128, 128, 8
    $region13: #{tpu_custom_call.1} parent=1 // pred_fallthru
      _
    // Predicated region
    $region14: #{tpu_custom_call.1} parent=1 // pred_check
      _
    $region15: #{tpu_custom_call.1} parent=1 // pred_check_branch
      %161 = sbr.rel (0) target = $region17
    $region16: #{tpu_custom_call.1} parent=1 // pred_region
      %162 = dma.done [#allocation4], 512
    $region17: #{tpu_custom_call.1} parent=1 // pred_fallthru
      _
    %163 = vsyncpa [#allocation3], 1
    %164 = vsyncpa [#allocation4], 1

</llo_original>
